<compile_context>
chip_gen: v7x
topology: tpu7x:2x2x1
jax: 0.10.0
libtpu: 0.0.40
codegen_flags: <defaults>
</compile_context>

<pallas_src>
import functools

import jax
import jax.numpy as jnp
from jax.experimental import pallas as pl
from jax.experimental.pallas import tpu as pltpu


# --------------------------------------------------------------------------- #
# Kernel bodies
# --------------------------------------------------------------------------- #
def _instance_norm_fold(x, w_bd, bias, eps):
    """Fold InstanceNorm2d (affine=False, biased var) into the block-diag matmul.

    x:    (bt*C, HW) f32  raw input rows (one row per (batch, channel)).
    w_bd: (bt*3, bt*C) f32 block-diagonal effective weight.
    bias: (bt*3, 1) f32.

    Returns (x_scaled, bias_eff) such that
        w_bd @ x_scaled + bias_eff == w_bd @ instance_norm(x) + bias.
    """
    f32 = jnp.float32
    inv_hw = 1.0 / x.shape[-1]
    mean = jnp.sum(x, axis=-1, keepdims=True) * inv_hw             # (bt*C, 1)
    ex2 = jnp.sum(x * x, axis=-1, keepdims=True) * inv_hw          # (bt*C, 1)
    inv_std = jax.lax.rsqrt(ex2 - mean * mean + eps)               # (bt*C, 1)
    x_scaled = x * inv_std                                         # single VPU pass
    bias_eff = bias - jnp.dot(w_bd, mean * inv_std,
                              preferred_element_type=f32)          # (bt*3, 1)
    return x_scaled, bias_eff


def _kernel_host_noise(x_ref, nz_ref, wbd_ref, wnbd_ref, bias_ref, o_ref, *, eps):
    """Parity path: full (bt*C, HW) host-provided Gaussian noise."""
    i = pl.program_id(0)
    f32 = jnp.float32
    x = x_ref[...].astype(f32)             # (bt*C, HW)
    nz = nz_ref[...].astype(f32)           # (bt*C, HW)
    w_bd = wbd_ref[i].astype(f32)          # (bt*3, bt*C)  (resident full array)
    wn_bd = wnbd_ref[i].astype(f32)        # (bt*3, bt*C)
    bias = bias_ref[...].astype(f32)       # (bt*3, 1)

    x_scaled, bias_eff = _instance_norm_fold(x, w_bd, bias, eps)
    acc = jnp.dot(w_bd, x_scaled, preferred_element_type=f32)      # (bt*3, HW)
    acc = acc + jnp.dot(wn_bd, nz, preferred_element_type=f32)
    o_ref[...] = jnp.tanh(acc + bias_eff).astype(o_ref.dtype)


def _kernel_proj_noise(x_ref, e_ref, wbd_ref, lbd_ref, bias_ref, o_ref, *, eps):
    """Optimized path: 3-channel projected noise (L @ e, with L L^T = NzW NzW^T)."""
    i = pl.program_id(0)
    f32 = jnp.float32
    x = x_ref[...].astype(f32)             # (bt*C, HW)
    e = e_ref[...].astype(f32)             # (bt*3, HW)
    w_bd = wbd_ref[i].astype(f32)          # (bt*3, bt*C)
    l_bd = lbd_ref[i].astype(f32)          # (bt*3, bt*3)
    bias = bias_ref[...].astype(f32)       # (bt*3, 1)

    x_scaled, bias_eff = _instance_norm_fold(x, w_bd, bias, eps)
    acc = jnp.dot(w_bd, x_scaled, preferred_element_type=f32)
    acc = acc + jnp.dot(l_bd, e, preferred_element_type=f32)
    o_ref[...] = jnp.tanh(acc + bias_eff).astype(o_ref.dtype)


# --------------------------------------------------------------------------- #
# Wrapper-side helpers (plain XLA, tiny)
# --------------------------------------------------------------------------- #
def _block_diag_tiles(w, bt):
    """(B, P, C) -> (B//bt, bt*P, bt*C) block-diagonal weight tiles."""
    b, p, c = w.shape
    g = b // bt
    w = w.reshape(g, bt, p, c)
    eye = jnp.eye(bt, dtype=w.dtype)
    wbd = jnp.einsum('gbpc,bd->gbpdc', w, eye)         # zero off the batch diagonal
    return wbd.reshape(g, bt * p, bt * c)


def _pick_block_b(batch, per_b_bytes, vmem_budget_bytes, min_step_bytes=1 << 20):
    """Largest batch tile whose working set fits the VMEM budget.

    Tiles smaller than the full batch keep bt a multiple of 8 so the
    (bt*3, HW) output / noise blocks stay sublane-aligned.  Prefers >= 2 grid
    steps (v7x megacore) when each step still moves enough bytes to hide the
    ~0.35 us per-step pipeline overhead.
    """
    cands = {batch} | {bt for bt in range(8, batch, 8) if batch % bt == 0}
    fitting = sorted(bt for bt in cands if bt * per_b_bytes <= vmem_budget_bytes)
    if not fitting:
        return min(cands)
    split = [bt for bt in fitting if bt < batch and bt * per_b_bytes >= min_step_bytes]
    if split:
        return max(split)
    return max(fitting)


def generation_g_forward(x, z, fc_w, fc_b, nz_w, img_w, *,
                         noise=None, rng_key=None,
                         w_noise=0.2, eps=1e-5, block_b=None,
                         vmem_budget_bytes=40 << 20):
    """Forward pass of Generation_G.

    x: (B, C, H, W); z: (B, zdim) style codes (torch.randn in the original).
    fc_w: (2C, zdim), fc_b: (2C,), nz_w: (C, C), img_w: (3, C).

    If `noise` (B, C, H, W) is given, the result matches the PyTorch module
    with that noise.  Otherwise statistically-equivalent 3-channel projected
    noise is sampled from `rng_key`.  Returns (B, 3, H, W) in x.dtype.
    """
    B, C, H, W = x.shape
    HW = H * W
    f32 = jnp.float32

    # ---- Style FC + algebraic fold (tiny O(B*C^2) XLA work) --------------- #
    h = z.astype(f32) @ fc_w.astype(f32).T + fc_b.astype(f32)            # (B, 2C)
    gamma, beta = h[:, :C], h[:, C:]
    a = img_w[None, :, :].astype(f32) * (1.0 + gamma)[:, None, :]        # (B, 3, C)
    nzw = w_noise * jnp.einsum('boc,ci->boi', a, nz_w.astype(f32))       # (B, 3, C)
    bias_col = jnp.einsum('oc,bc->bo', img_w.astype(f32), beta).reshape(B * 3, 1)

    x2 = x.reshape(B * C, HW)
    out_dtype = x.dtype
    isz = jnp.dtype(x.dtype).itemsize
    osz = jnp.dtype(out_dtype).itemsize

    use_host_noise = noise is not None
    nsz = jnp.dtype(noise.dtype).itemsize if use_host_noise else 4
    noise_rows = C if use_host_noise else 3
    # Per-batch working set: double-buffered HBM streams + f32 compute temps.
    stream_b = (C * HW * isz) + (noise_rows * HW * nsz) + (3 * HW * osz)
    temp_b = (2 * C + 2 * 3) * HW * 4
    per_b_bytes = 2 * stream_b + temp_b

    bt = block_b if block_b is not None else _pick_block_b(
        B, per_b_bytes, vmem_budget_bytes)
    if B % bt != 0:
        raise ValueError(f"block_b={bt} must divide batch={B}")
    g = B // bt
    if g > 1 and ((bt * 3) % 8 != 0 or (bt * C) % 8 != 0):
        raise ValueError("for grid > 1 choose bt as a multiple of 8")

    # Block-diagonal per-tile weights -> one dense MXU matmul per grid step.
    w_bd_tiles = _block_diag_tiles(a, bt)                                # (g, bt*3, bt*C)

    x_spec = pl.BlockSpec((bt * C, HW), lambda i: (i, 0))
    out_spec = pl.BlockSpec((bt * 3, HW), lambda i: (i, 0))
    bias_spec = pl.BlockSpec((bt * 3, 1), lambda i: (i, 0))
    wbd_spec = pl.BlockSpec((g, bt * 3, bt * C), lambda i: (0, 0, 0))    # resident
    out_shape = jax.ShapeDtypeStruct((B * 3, HW), out_dtype)

    if use_host_noise:
        noise2 = noise.reshape(B * C, HW)
        wn_bd_tiles = _block_diag_tiles(nzw, bt)                         # (g, bt*3, bt*C)
        resident_bytes = (w_bd_tiles.size + wn_bd_tiles.size + bias_col.size) * 4
        kernel = functools.partial(_kernel_host_noise, eps=eps)
        in_specs = [x_spec,
                    pl.BlockSpec((bt * C, HW), lambda i: (i, 0)),
                    wbd_spec, wbd_spec, bias_spec]
        operands = (x2, noise2, w_bd_tiles, wn_bd_tiles, bias_col)
    else:
        if rng_key is None:
            rng_key = jax.random.PRNGKey(0)
        # Per pixel, NzW @ randn(C) ~ N(0, NzW NzW^T): sample 3-ch projected noise.
        cov = jnp.einsum('boc,bpc->bop', nzw, nzw)                       # (B, 3, 3)
        scale = jnp.trace(cov, axis1=-2, axis2=-1) / 3.0
        jitter = (1e-6 * scale + 1e-20)[:, None, None] * jnp.eye(3, dtype=f32)
        l_chol = jnp.linalg.cholesky(cov + jitter)                       # (B, 3, 3)
        l_bd_tiles = _block_diag_tiles(l_chol, bt)                       # (g, bt*3, bt*3)
        e = jax.random.normal(rng_key, (B * 3, HW), dtype=f32)
        resident_bytes = (w_bd_tiles.size + l_bd_tiles.size + bias_col.size) * 4
        kernel = functools.partial(_kernel_proj_noise, eps=eps)
        lbd_spec = pl.BlockSpec((g, bt * 3, bt * 3), lambda i: (0, 0, 0))
        in_specs = [x_spec,
                    pl.BlockSpec((bt * 3, HW), lambda i: (i, 0)),
                    wbd_spec, lbd_spec, bias_spec]
        operands = (x2, e, w_bd_tiles, l_bd_tiles, bias_col)

    working = bt * per_b_bytes + resident_bytes
    # Explicit scoped-VMEM limit: safe on v5e (16 MiB default) and capped so it
    # never exceeds v7x's 64 MiB physical VMEM per core.
    vmem_limit = int(min(64 << 20, max(32 << 20, int(1.25 * working))))
    cparams = pltpu.CompilerParams(dimension_semantics=("parallel",),
                                   vmem_limit_bytes=vmem_limit)

    out = pl.pallas_call(
        kernel,
        out_shape=out_shape,
        grid_spec=pltpu.PrefetchScalarGridSpec(
            num_scalar_prefetch=0,
            grid=(g,),
            in_specs=in_specs,
            out_specs=out_spec),
        compiler_params=cparams,
    )(*operands)

    return out.reshape(B, 3, H, W)


# --------------------------------------------------------------------------- #
# Pure-JAX reference (matches the PyTorch module)
# --------------------------------------------------------------------------- #
def _reference_forward(x, z, noise, fc_w, fc_b, nz_w, img_w, *,
                       w_noise=0.2, eps=1e-5):
    B, C, H, W = x.shape
    h = z @ fc_w.T + fc_b                                   # (B, 2C)
    gamma = h[:, :C][:, :, None, None]
    beta = h[:, C:][:, :, None, None]
    mean = jnp.mean(x, axis=(2, 3), keepdims=True)
    var = jnp.mean((x - mean) ** 2, axis=(2, 3), keepdims=True)
    x_norm = (x - mean) / jnp.sqrt(var + eps)
    noise_out = jnp.einsum('oc,bchw->bohw', nz_w, noise)
    norm_x = x_norm + w_noise * noise_out
    y = (1.0 + gamma) * norm_x + beta
    return jnp.tanh(jnp.einsum('oc,bchw->bohw', img_w, y))


if __name__ == "__main__":
    ZDIM = 10
    W_NOISE = 0.2
    C = 16

    kp1, kp2, kp3, kp4 = jax.random.split(jax.random.PRNGKey(0), 4)
    # Parameters (shapes from __init__: Linear(zdim, 2n), conv1x1(n,n), conv1x1(n,3)).
    fc_w = jax.random.normal(kp1, (2 * C, ZDIM), jnp.float32) * 0.1
    fc_b = jax.random.normal(kp2, (2 * C,), jnp.float32) * 0.1
    nz_w = jax.random.normal(kp3, (C, C), jnp.float32) * 0.1
    img_w = jax.random.normal(kp4, (3, C), jnp.float32) * 0.1

    def run_case(seed, B, H, W, block_b=None):
        ks = jax.random.split(jax.random.PRNGKey(seed), 4)
        x = jax.random.normal(ks[0], (B, C, H, W), jnp.float32)
        # torch.randn(len(x), zdim) / torch.randn_like(x) -> deterministic stand-ins.
        z = jax.random.normal(ks[1], (B, ZDIM), jnp.float32)
        noise = jax.random.normal(ks[2], (B, C, H, W), jnp.float32)

        # Parity path (host-provided noise) vs. pure-JAX reference.
        out = generation_g_forward(x, z, fc_w, fc_b, nz_w, img_w,
                                   noise=noise, w_noise=W_NOISE, block_b=block_b)
        out = jax.block_until_ready(out)
        ref = _reference_forward(x, z, noise, fc_w, fc_b, nz_w, img_w,
                                 w_noise=W_NOISE)
        assert out.shape == (B, 3, H, W)
        assert jnp.allclose(out, ref, atol=1e-4, rtol=1e-4), "mismatch vs reference"

        # Bandwidth-optimized projected-noise path (statistical match only).
        out_rng = generation_g_forward(x, z, fc_w, fc_b, nz_w, img_w,
                                       noise=None, rng_key=ks[3],
                                       w_noise=W_NOISE, block_b=block_b)
        out_rng = jax.block_until_ready(out_rng)
        assert out_rng.shape == (B, 3, H, W)
        assert bool(jnp.all(jnp.isfinite(out_rng)))
        assert bool(jnp.all(jnp.abs(out_rng) <= 1.0))       # tanh output range

    run_case(1, B=4, H=16, W=16)                 # grid=(1,), full-batch tile
    run_case(2, B=16, H=16, W=16, block_b=8)     # grid=(2,), sublane-aligned tiles
    print("KERNEL_OK")
</pallas_src>

<mosaic_0001>
module attributes {stable_mosaic.version = 11 : i64} {
  func.func @_kernel_host_noise(%arg0: i32, %arg1: memref<64x256xf32, #tpu.memory_space<vmem>>, %arg2: memref<64x256xf32, #tpu.memory_space<vmem>>, %arg3: memref<1x12x64xf32, #tpu.memory_space<vmem>>, %arg4: memref<1x12x64xf32, #tpu.memory_space<vmem>>, %arg5: memref<12x1xf32, #tpu.memory_space<vmem>>, %arg6: memref<12x256xf32, #tpu.memory_space<vmem>>) attributes {dimension_semantics = [#tpu.dimension_semantics<parallel>], iteration_bounds = array<i64: 1>, scalar_prefetch = 0 : i64, scratch_operands = 0 : i64, tpu.core_type = #tpu.core_type<tc>, window_params = [{transform_indices = @transform_0, window_bounds = array<i64: 64, 256>}, {transform_indices = @transform_1, window_bounds = array<i64: 64, 256>}, {pipeline_mode = #tpu.pipeline_mode<synchronous>, transform_indices = @transform_2, window_bounds = array<i64: 1, 12, 64>}, {pipeline_mode = #tpu.pipeline_mode<synchronous>, transform_indices = @transform_3, window_bounds = array<i64: 1, 12, 64>}, {transform_indices = @transform_4, window_bounds = array<i64: 12, 1>}, {transform_indices = @transform_5, window_bounds = array<i64: 12, 256>}]} {
    %c0 = arith.constant 0 : index
    %c0_0 = arith.constant 0 : index
    %0 = vector.load %arg1[%c0, %c0_0] : memref<64x256xf32, #tpu.memory_space<vmem>>, vector<64x256xf32>
    %c0_1 = arith.constant 0 : index
    %c0_2 = arith.constant 0 : index
    %1 = vector.load %arg2[%c0_1, %c0_2] : memref<64x256xf32, #tpu.memory_space<vmem>>, vector<64x256xf32>
    %2 = arith.index_cast %arg0 : i32 to index
    %c0_3 = arith.constant 0 : index
    %c0_4 = arith.constant 0 : index
    %3 = vector.load %arg3[%2, %c0_3, %c0_4] : memref<1x12x64xf32, #tpu.memory_space<vmem>>, vector<1x12x64xf32>
    %4 = vector.shape_cast %3 : vector<1x12x64xf32> to vector<12x64xf32>
    %5 = arith.index_cast %arg0 : i32 to index
    %c0_5 = arith.constant 0 : index
    %c0_6 = arith.constant 0 : index
    %6 = vector.load %arg4[%5, %c0_5, %c0_6] : memref<1x12x64xf32, #tpu.memory_space<vmem>>, vector<1x12x64xf32>
    %7 = vector.shape_cast %6 : vector<1x12x64xf32> to vector<12x64xf32>
    %c0_7 = arith.constant 0 : index
    %c0_8 = arith.constant 0 : index
    %8 = vector.load %arg5[%c0_7, %c0_8] : memref<12x1xf32, #tpu.memory_space<vmem>>, vector<12x1xf32>
    %cst = arith.constant dense<0.000000e+00> : vector<64xf32>
    %9 = vector.multi_reduction <add>, %0, %cst [1] : vector<64x256xf32> to vector<64xf32>
    %10 = vector.shape_cast %9 : vector<64xf32> to vector<64x1xf32>
    %cst_9 = arith.constant 3.906250e-03 : f32
    %11 = vector.broadcast %cst_9 : f32 to vector<64x1xf32>
    %12 = arith.mulf %10, %11 : vector<64x1xf32>
    %13 = arith.mulf %0, %0 : vector<64x256xf32>
    %cst_10 = arith.constant dense<0.000000e+00> : vector<64xf32>
    %14 = vector.multi_reduction <add>, %13, %cst_10 [1] : vector<64x256xf32> to vector<64xf32>
    %15 = vector.shape_cast %14 : vector<64xf32> to vector<64x1xf32>
    %cst_11 = arith.constant 3.906250e-03 : f32
    %16 = vector.broadcast %cst_11 : f32 to vector<64x1xf32>
    %17 = arith.mulf %15, %16 : vector<64x1xf32>
    %18 = arith.mulf %12, %12 : vector<64x1xf32>
    %19 = arith.subf %17, %18 : vector<64x1xf32>
    %cst_12 = arith.constant 9.99999974E-6 : f32
    %20 = vector.broadcast %cst_12 : f32 to vector<64x1xf32>
    %21 = arith.addf %19, %20 : vector<64x1xf32>
    %22 = math.rsqrt %21 : vector<64x1xf32>
    %23 = vector.broadcast %22 : vector<64x1xf32> to vector<64x256xf32>
    %24 = arith.mulf %0, %23 : vector<64x256xf32>
    %25 = arith.mulf %12, %22 : vector<64x1xf32>
    %cst_13 = arith.constant dense<0.000000e+00> : vector<12x1xf32>
    %26 = tpu.matmul %4, %25, %cst_13 {dimension_numbers = #tpu.dot_dimension_numbers<[1], [0], [0], [1], [0, 0, 1, 1], [], []>} : vector<12x64xf32>, vector<64x1xf32>, vector<12x1xf32> -> vector<12x1xf32>
    %27 = arith.subf %8, %26 : vector<12x1xf32>
    %cst_14 = arith.constant dense<0.000000e+00> : vector<12x256xf32>
    %28 = tpu.matmul %4, %24, %cst_14 {dimension_numbers = #tpu.dot_dimension_numbers<[1], [0], [0], [1], [0, 0, 1, 1], [], []>} : vector<12x64xf32>, vector<64x256xf32>, vector<12x256xf32> -> vector<12x256xf32>
    %cst_15 = arith.constant dense<0.000000e+00> : vector<12x256xf32>
    %29 = tpu.matmul %7, %1, %cst_15 {dimension_numbers = #tpu.dot_dimension_numbers<[1], [0], [0], [1], [0, 0, 1, 1], [], []>} : vector<12x64xf32>, vector<64x256xf32>, vector<12x256xf32> -> vector<12x256xf32>
    %30 = arith.addf %28, %29 : vector<12x256xf32>
    %31 = vector.broadcast %27 : vector<12x1xf32> to vector<12x256xf32>
    %32 = arith.addf %30, %31 : vector<12x256xf32>
    %33 = math.tanh %32 : vector<12x256xf32>
    %c0_16 = arith.constant 0 : index
    %c0_17 = arith.constant 0 : index
    %34 = vector.load %arg6[%c0_16, %c0_17] : memref<12x256xf32, #tpu.memory_space<vmem>>, vector<12x256xf32>
    tpu.vector_store %arg6[%c0_16, %c0_17], %33 {strides = array<i32>} : memref<12x256xf32, #tpu.memory_space<vmem>>, vector<12x256xf32>,
    return
  }
  func.func @transform_0(%arg0: i32) -> (i32, i32) {
    %c0_i32 = arith.constant 0 : i32
    %c0_i32_0 = arith.constant 0 : i32
    return %arg0, %c0_i32 : i32, i32
  }
  func.func @transform_1(%arg0: i32) -> (i32, i32) {
    %c0_i32 = arith.constant 0 : i32
    %c0_i32_0 = arith.constant 0 : i32
    return %arg0, %c0_i32 : i32, i32
  }
  func.func @transform_2(%arg0: i32) -> (i32, i32, i32) {
    %c0_i32 = arith.constant 0 : i32
    %c0_i32_0 = arith.constant 0 : i32
    %c0_i32_1 = arith.constant 0 : i32
    %c0_i32_2 = arith.constant 0 : i32
    return %c0_i32, %c0_i32_0, %c0_i32_1 : i32, i32, i32
  }
  func.func @transform_3(%arg0: i32) -> (i32, i32, i32) {
    %c0_i32 = arith.constant 0 : i32
    %c0_i32_0 = arith.constant 0 : i32
    %c0_i32_1 = arith.constant 0 : i32
    %c0_i32_2 = arith.constant 0 : i32
    return %c0_i32, %c0_i32_0, %c0_i32_1 : i32, i32, i32
  }
  func.func @transform_4(%arg0: i32) -> (i32, i32) {
    %c0_i32 = arith.constant 0 : i32
    %c0_i32_0 = arith.constant 0 : i32
    return %arg0, %c0_i32 : i32, i32
  }
  func.func @transform_5(%arg0: i32) -> (i32, i32) {
    %c0_i32 = arith.constant 0 : i32
    %c0_i32_0 = arith.constant 0 : i32
    return %arg0, %c0_i32 : i32, i32
  }
}

</mosaic_0001>

<llo_original>
// kernel: tpu_custom_call.1
$region0: #{tpu_custom_call.1}
  #allocation0 [shape = 'u32[]', space=smem, size = 0x4, offset = 0x4, fixed_abs, tag = 'smem constant byte address 0x4 - core index']
  #allocation1 [shape = 'u32[144,128]{1,0:T(1,128)}', space=vmem, size = 0x12000, scoped, tag = 'internal scratch']
  %s0 = inlined_call_operand.hbm [shape: f32[64,256], index: 0, kind: input, shape index: {}]
  %s1 = inlined_call_operand.hbm [shape: f32[64,256], index: 1, kind: input, shape index: {}]
  %s2 = inlined_call_operand.vmem [shape: f32[1,12,64], index: 2, kind: input, shape index: {}]
  %s3 = inlined_call_operand.vmem [shape: f32[1,12,64], index: 3, kind: input, shape index: {}]
  %s4 = inlined_call_operand.vmem [shape: f32[12,1], index: 4, kind: input, shape index: {}]
  %s5 = inlined_call_operand.hbm [shape: f32[12,256], index: 5, kind: output, shape index: {}]
  %s6 = sld [smem:[#allocation0]]
  $region38: #{tpu_custom_call.1} parent=0
    _
  %s8 = ssub.s32 1, %s6
  %s9 = scalar_select 0, %s8, %s6
  $region1: #{tpu_custom_call.1} parent=0
    #allocation2 [shape = 'u8[65536]{0}', space=vmem, size = 0x10000, scoped, tag = 'input window, operand 0, single buffered']
    #allocation3 [shape = 's32[1]{0}', space=sflag, size = 0x4, scoped, tag = 'scoped memory for tpu_custom_call.1']
    #allocation4 [shape = 's32[1]{0}', space=sflag, size = 0x4, scoped, tag = 'scoped memory for tpu_custom_call.1']
    #allocation5 [shape = 'u8[65536]{0}', space=vmem, size = 0x10000, scoped, tag = 'input window, operand 1, single buffered']
    #allocation6 [shape = 's32[1]{0}', space=sflag, size = 0x4, scoped, tag = 'scoped memory for tpu_custom_call.1']
    #allocation7 [shape = 'u8[16384]{0}', space=vmem, size = 0x4000, scoped, tag = 'output window, operand 0, single buffered']
    %10 = vsyncpa [#allocation3], 0
    %11 = vsyncpa [#allocation6], 0
    %12 = vsyncpa [#allocation4], 0
    // Predicated region
    $region2: #{tpu_custom_call.1} parent=1 // pred_check
      _
    $region3: #{tpu_custom_call.1} parent=1 // pred_check_branch
      %14 = sbr.rel (0) target = $region5
    $region4: #{tpu_custom_call.1} parent=1 // pred_region
      %s16 = ssub.s32 2048, 2048
      %17 = vsyncadd [#allocation3], %s16
      %s18 = sshll.u32 [#allocation2], 4
      %s19 = int_to_ptr.vmem [resolvable:$true] %s18
      %24 = dma.hbm_to_vmem [thread:$0]  %s0, 2048, %s19, [#allocation3], 256, 256, 16
    $region5: #{tpu_custom_call.1} parent=1 // pred_fallthru
      _
    // Predicated region
    $region6: #{tpu_custom_call.1} parent=1 // pred_check
      _
    $region7: #{tpu_custom_call.1} parent=1 // pred_check_branch
      %26 = sbr.rel (0) target = $region9
    $region8: #{tpu_custom_call.1} parent=1 // pred_region
      %s28 = ssub.s32 2048, 2048
      %29 = vsyncadd [#allocation6], %s28
      %s30 = sshll.u32 [#allocation5], 4
      %s31 = int_to_ptr.vmem [resolvable:$true] %s30
      %36 = dma.hbm_to_vmem [thread:$0]  %s1, 2048, %s31, [#allocation6], 256, 256, 16
    $region9: #{tpu_custom_call.1} parent=1 // pred_fallthru
      _
    // Predicated region
    $region10: #{tpu_custom_call.1} parent=1 // pred_check
      _
    $region11: #{tpu_custom_call.1} parent=1 // pred_check_branch
      %38 = sbr.rel (0) target = $region13
    $region12: #{tpu_custom_call.1} parent=1 // pred_region
      _
    $region13: #{tpu_custom_call.1} parent=1 // pred_fallthru
      _
    // Predicated region
    $region14: #{tpu_custom_call.1} parent=1 // pred_check
      _
    $region15: #{tpu_custom_call.1} parent=1 // pred_check_branch
      %40 = sbr.rel (0) target = $region17
    $region16: #{tpu_custom_call.1} parent=1 // pred_region
      _
    $region17: #{tpu_custom_call.1} parent=1 // pred_fallthru
      _
    // Predicated region
    $region18: #{tpu_custom_call.1} parent=1 // pred_check
      _
    $region19: #{tpu_custom_call.1} parent=1 // pred_check_branch
      %42 = sbr.rel (0) target = $region21
    $region20: #{tpu_custom_call.1} parent=1 // pred_region
      _
    $region21: #{tpu_custom_call.1} parent=1 // pred_fallthru
      _
    // Predicated region
    $region22: #{tpu_custom_call.1} parent=1 // pred_check
      _
    $region23: #{tpu_custom_call.1} parent=1 // pred_check_branch
      %44 = sbr.rel (0) target = $region25
    $region24: #{tpu_custom_call.1} parent=1 // pred_region
      %45 = dma.done [#allocation3], 2048
    $region25: #{tpu_custom_call.1} parent=1 // pred_fallthru
      _
    // Predicated region
    $region26: #{tpu_custom_call.1} parent=1 // pred_check
      _
    $region27: #{tpu_custom_call.1} parent=1 // pred_check_branch
      %47 = sbr.rel (0) target = $region29
    $region28: #{tpu_custom_call.1} parent=1 // pred_region
      %48 = dma.done [#allocation6], 2048
    $region29: #{tpu_custom_call.1} parent=1 // pred_fallthru
      _
    %v49 = vld [vmem:[#allocation2] sm:$0xff]
    %v50 = vld [vmem:[#allocation2 + $0x8] sm:$0xff]
    %v51 = vld [vmem:[#allocation2 + $0x10] sm:$0xff]
    %v52 = vld [vmem:[#allocation2 + $0x18] sm:$0xff]
    %v53 = vld [vmem:[#allocation2 + $0x20] sm:$0xff]
    %v54 = vld [vmem:[#allocation2 + $0x28] sm:$0xff]
    %v55 = vld [vmem:[#allocation2 + $0x30] sm:$0xff]
    %v56 = vld [vmem:[#allocation2 + $0x38] sm:$0xff]
    %v57 = vld [vmem:[#allocation2 + $0x40] sm:$0xff]
    %v58 = vld [vmem:[#allocation2 + $0x48] sm:$0xff]
    %v59 = vld [vmem:[#allocation2 + $0x50] sm:$0xff]
    %v60 = vld [vmem:[#allocation2 + $0x58] sm:$0xff]
    %v61 = vld [vmem:[#allocation2 + $0x60] sm:$0xff]
    %v62 = vld [vmem:[#allocation2 + $0x68] sm:$0xff]
    %v63 = vld [vmem:[#allocation2 + $0x70] sm:$0xff]
    %v64 = vld [vmem:[#allocation2 + $0x78] sm:$0xff]
    %v65 = vld [vmem:[#allocation5] sm:$0xff]
    %v66 = vld [vmem:[#allocation5 + $0x8] sm:$0xff]
    %v67 = vld [vmem:[#allocation5 + $0x10] sm:$0xff]
    %v68 = vld [vmem:[#allocation5 + $0x18] sm:$0xff]
    %v69 = vld [vmem:[#allocation5 + $0x20] sm:$0xff]
    %v70 = vld [vmem:[#allocation5 + $0x28] sm:$0xff]
    %v71 = vld [vmem:[#allocation5 + $0x30] sm:$0xff]
    %v72 = vld [vmem:[#allocation5 + $0x38] sm:$0xff]
    %v73 = vld [vmem:[#allocation5 + $0x40] sm:$0xff]
    %v74 = vld [vmem:[#allocation5 + $0x48] sm:$0xff]
    %v75 = vld [vmem:[#allocation5 + $0x50] sm:$0xff]
    %v76 = vld [vmem:[#allocation5 + $0x58] sm:$0xff]
    %v77 = vld [vmem:[#allocation5 + $0x60] sm:$0xff]
    %v78 = vld [vmem:[#allocation5 + $0x68] sm:$0xff]
    %v79 = vld [vmem:[#allocation5 + $0x70] sm:$0xff]
    %v80 = vld [vmem:[#allocation5 + $0x78] sm:$0xff]
    %s81 = smul.u32 0, 16
    %s82 = scalar_lea.vmem %s2, %s81
    %v83 = vld [vmem:[%s82] sm:$0xff]
    %v84 = vld [vmem:[%s82 + $0x8] sm:$0xf]
    %s85 = scalar_lea.vmem %s3, %s81
    %v86 = vld [vmem:[%s85] sm:$0xff]
    %v87 = vld [vmem:[%s85 + $0x8] sm:$0xf]
    %v88 = vld [vmem:[%s4] sm:$0xff]
    %v89 = vld [vmem:[%s4 + $0x8] sm:$0xf]
    %v90 = vadd.f32 %v49, %v50
    %91 = vadd.xlane.f32.xlu0 %v90
    %v92 = vpop.xlane.xlu0 %91
    %v93 = vadd.f32 %v51, %v52
    %94 = vadd.xlane.f32.xlu0 %v93
    %v95 = vpop.xlane.xlu0 %94
    %v96 = vadd.f32 %v53, %v54
    %97 = vadd.xlane.f32.xlu0 %v96
    %v98 = vpop.xlane.xlu0 %97
    %v99 = vadd.f32 %v55, %v56
    %100 = vadd.xlane.f32.xlu0 %v99
    %v101 = vpop.xlane.xlu0 %100
    %v102 = vadd.f32 %v57, %v58
    %103 = vadd.xlane.f32.xlu0 %v102
    %v104 = vpop.xlane.xlu0 %103
    %v105 = vadd.f32 %v59, %v60
    %106 = vadd.xlane.f32.xlu0 %v105
    %v107 = vpop.xlane.xlu0 %106
    %v108 = vadd.f32 %v61, %v62
    %109 = vadd.xlane.f32.xlu0 %v108
    %v110 = vpop.xlane.xlu0 %109
    %v111 = vadd.f32 %v63, %v64
    %112 = vadd.xlane.f32.xlu0 %v111
    %v113 = vpop.xlane.xlu0 %112
    %v114 = vmul.f32 %v92, 0.00390625
    %v115 = vmul.f32 %v95, 0.00390625
    %v116 = vmul.f32 %v98, 0.00390625
    %v117 = vmul.f32 %v101, 0.00390625
    %v118 = vmul.f32 %v104, 0.00390625
    %v119 = vmul.f32 %v107, 0.00390625
    %v120 = vmul.f32 %v110, 0.00390625
    %v121 = vmul.f32 %v113, 0.00390625
    %v122 = vmul.f32 %v49, %v49
    %v123 = vmul.f32 %v50, %v50
    %v124 = vmul.f32 %v51, %v51
    %v125 = vmul.f32 %v52, %v52
    %v126 = vmul.f32 %v53, %v53
    %v127 = vmul.f32 %v54, %v54
    %v128 = vmul.f32 %v55, %v55
    %v129 = vmul.f32 %v56, %v56
    %v130 = vmul.f32 %v57, %v57
    %v131 = vmul.f32 %v58, %v58
    %v132 = vmul.f32 %v59, %v59
    %v133 = vmul.f32 %v60, %v60
    %v134 = vmul.f32 %v61, %v61
    %v135 = vmul.f32 %v62, %v62
    %v136 = vmul.f32 %v63, %v63
    %v137 = vmul.f32 %v64, %v64
    %v138 = vadd.f32 %v122, %v123
    %139 = vadd.xlane.f32.xlu0 %v138
    %v140 = vpop.xlane.xlu0 %139
    %v141 = vadd.f32 %v124, %v125
    %142 = vadd.xlane.f32.xlu0 %v141
    %v143 = vpop.xlane.xlu0 %142
    %v144 = vadd.f32 %v126, %v127
    %145 = vadd.xlane.f32.xlu0 %v144
    %v146 = vpop.xlane.xlu0 %145
    %v147 = vadd.f32 %v128, %v129
    %148 = vadd.xlane.f32.xlu0 %v147
    %v149 = vpop.xlane.xlu0 %148
    %v150 = vadd.f32 %v130, %v131
    %151 = vadd.xlane.f32.xlu0 %v150
    %v152 = vpop.xlane.xlu0 %151
    %v153 = vadd.f32 %v132, %v133
    %154 = vadd.xlane.f32.xlu0 %v153
    %v155 = vpop.xlane.xlu0 %154
    %v156 = vadd.f32 %v134, %v135
    %157 = vadd.xlane.f32.xlu0 %v156
    %v158 = vpop.xlane.xlu0 %157
    %v159 = vadd.f32 %v136, %v137
    %160 = vadd.xlane.f32.xlu0 %v159
    %v161 = vpop.xlane.xlu0 %160
    %v162 = vmul.f32 %v140, 0.00390625
    %v163 = vmul.f32 %v143, 0.00390625
    %v164 = vmul.f32 %v146, 0.00390625
    %v165 = vmul.f32 %v149, 0.00390625
    %v166 = vmul.f32 %v152, 0.00390625
    %v167 = vmul.f32 %v155, 0.00390625
    %v168 = vmul.f32 %v158, 0.00390625
    %v169 = vmul.f32 %v161, 0.00390625
    %v170 = vmul.f32 %v114, %v114
    %v171 = vmul.f32 %v115, %v115
    %v172 = vmul.f32 %v116, %v116
    %v173 = vmul.f32 %v117, %v117
    %v174 = vmul.f32 %v118, %v118
    %v175 = vmul.f32 %v119, %v119
    %v176 = vmul.f32 %v120, %v120
    %v177 = vmul.f32 %v121, %v121
    %v178 = vsub.f32 %v162, %v170
    %v179 = vsub.f32 %v163, %v171
    %v180 = vsub.f32 %v164, %v172
    %v181 = vsub.f32 %v165, %v173
    %v182 = vsub.f32 %v166, %v174
    %v183 = vsub.f32 %v167, %v175
    %v184 = vsub.f32 %v168, %v176
    %v185 = vsub.f32 %v169, %v177
    %v186 = vadd.f32 %v178, 1e-05
    %v187 = vadd.f32 %v179, 1e-05
    %v188 = vadd.f32 %v180, 1e-05
    %v189 = vadd.f32 %v181, 1e-05
    %v190 = vadd.f32 %v182, 1e-05
    %v191 = vadd.f32 %v183, 1e-05
    %v192 = vadd.f32 %v184, 1e-05
    %v193 = vadd.f32 %v185, 1e-05
    %v194 = vrsqrt.pop %v186
    %v195 = vrsqrt.pop %v187
    %v196 = vrsqrt.pop %v188
    %v197 = vrsqrt.pop %v189
    %v198 = vrsqrt.pop %v190
    %v199 = vrsqrt.pop %v191
    %v200 = vrsqrt.pop %v192
    %v201 = vrsqrt.pop %v193
    %v202 = vmul.f32 %v49, %v194
    %v203 = vmul.f32 %v50, %v194
    %v204 = vmul.f32 %v51, %v195
    %v205 = vmul.f32 %v52, %v195
    %v206 = vmul.f32 %v53, %v196
    %v207 = vmul.f32 %v54, %v196
    %v208 = vmul.f32 %v55, %v197
    %v209 = vmul.f32 %v56, %v197
    %v210 = vmul.f32 %v57, %v198
    %v211 = vmul.f32 %v58, %v198
    %v212 = vmul.f32 %v59, %v199
    %v213 = vmul.f32 %v60, %v199
    %v214 = vmul.f32 %v61, %v200
    %v215 = vmul.f32 %v62, %v200
    %v216 = vmul.f32 %v63, %v201
    %v217 = vmul.f32 %v64, %v201
    %v218 = vmul.f32 %v114, %v194
    %v219 = vmul.f32 %v115, %v195
    %v220 = vmul.f32 %v116, %v196
    %v221 = vmul.f32 %v117, %v197
    %v222 = vmul.f32 %v118, %v198
    %v223 = vmul.f32 %v119, %v199
    %v224 = vmul.f32 %v120, %v200
    %v225 = vmul.f32 %v121, %v201
    %vm226 = vcmask 523264
    %v228 = vsel %vm226, %v83, 0
    %v231 = vsel %vm226, %v84, 0
    %233 = vmatprep.subr.mxu0 0.0
    %234 = vmatpush1.msra.mxu0 %v218
    %235 = vmatprep.subr.mxu0 0.0
    %236 = vmatpush1.msra.mxu0 %v219
    %237 = vmatprep.subr.mxu0 0.0
    %238 = vmatpush1.msra.mxu0 %v220
    %239 = vmatprep.subr.mxu0 0.0
    %240 = vmatpush1.msra.mxu0 %v221
    %241 = vmatprep.subr.mxu0 0.0
    %242 = vmatpush1.msra.mxu0 %v222
    %243 = vmatprep.subr.mxu0 0.0
    %244 = vmatpush1.msra.mxu0 %v223
    %245 = vmatprep.subr.mxu0 0.0
    %246 = vmatpush1.msra.mxu0 %v224
    %247 = vmatprep.subr.mxu0 0.0
    %248 = vmatpush1.msra.mxu0 %v225
    %249 = vmatprep.subr.mxu0 0.0
    %250 = vmatpush1.msra.mxu0 0.0
    %251 = vmatprep.subr.mxu0 0.0
    %252 = vmatpush1.msra.mxu0 0.0
    %253 = vmatprep.subr.mxu0 0.0
    %254 = vmatpush1.msra.mxu0 0.0
    %255 = vmatprep.subr.mxu0 0.0
    %256 = vmatpush1.msra.mxu0 0.0
    %257 = vmatprep.subr.mxu0 0.0
    %258 = vmatpush1.msra.mxu0 0.0
    %259 = vmatprep.subr.mxu0 0.0
    %260 = vmatpush1.msra.mxu0 0.0
    %261 = vmatprep.subr.mxu0 0.0
    %262 = vmatpush1.msra.mxu0 0.0
    %263 = vmatprep.subr.mxu0 0.0
    %264 = vmatpush1.msra.mxu0 0.0
    %265 = vmatprep.subr.mxu0 0.0
    %266 = vmatpush1.msra.mxu0 0.0
    %267 = vmatprep.subr.mxu0 0.0
    %268 = vmatpush1.msra.mxu0 0.0
    %269 = vmatprep.subr.mxu0 0.0
    %270 = vmatpush1.msra.mxu0 0.0
    %271 = vmatprep.subr.mxu0 0.0
    %272 = vmatpush1.msra.mxu0 0.0
    %273 = vmatprep.subr.mxu0 0.0
    %274 = vmatpush1.msra.mxu0 0.0
    %275 = vmatprep.subr.mxu0 0.0
    %276 = vmatpush1.msra.mxu0 0.0
    %277 = vmatprep.subr.mxu0 0.0
    %278 = vmatpush1.msra.mxu0 0.0
    %279 = vmatprep.subr.mxu0 0.0
    %280 = vmatpush1.msra.mxu0 0.0
    %281 = vmatprep.subr.mxu0 0.0
    %282 = vmatpush1.msra.mxu0 0.0
    %283 = vmatprep.subr.mxu0 0.0
    %284 = vmatpush1.msra.mxu0 0.0
    %285 = vmatprep.subr.mxu0 0.0
    %286 = vmatpush1.msra.mxu0 0.0
    %287 = vmatprep.subr.mxu0 0.0
    %288 = vmatpush1.msra.mxu0 0.0
    %289 = vmatprep.subr.mxu0 0.0
    %290 = vmatpush1.msra.mxu0 0.0
    %291 = vmatprep.subr.mxu0 0.0
    %292 = vmatpush1.msra.mxu0 0.0
    %293 = vmatprep.subr.mxu0 0.0
    %294 = vmatpush1.msra.mxu0 0.0
    %295 = vmatprep.subr.mxu0 0.0
    %296 = vmatpush1.msra.mxu0 0.0
    %297 = vmatprep.mubr.f32.mxu0 0.0
    %298 = vmatmul.mubr.f32.gmra.mrb[0].mxu0 %v228
    %v299 = vpop.f32.mrb[0].mxu0
    %v300 = vadd.f32 0.0, %v299
    %v301 = vpop.f32.mrb[0].mxu0
    %302 = vmatprep.mubr.f32.mxu0 0.0
    %303 = vmatmul.mubr.f32.gmra.mrb[0].mxu0 %v231
    %v304 = vpop.f32.mrb[0].mxu0
    %v305 = vadd.f32 0.0, %v304
    %v306 = vpop.f32.mrb[0].mxu0
    %307 = vdwg.mxu0
    %v308 = vsub.f32 %v88, %v300
    %v309 = vsub.f32 %v89, %v305
    %v311 = vsel %vm226, %v86, 0
    %v314 = vsel %vm226, %v87, 0
    %316 = vmatprep.subr.mxu0 %v66
    %317 = vmatpush1.msra.mxu0 %v65
    %318 = vmatprep.subr.mxu0 %v68
    %319 = vmatpush1.msra.mxu0 %v67
    %320 = vmatprep.subr.mxu0 %v70
    %321 = vmatpush1.msra.mxu0 %v69
    %322 = vmatprep.subr.mxu0 %v72
    %323 = vmatpush1.msra.mxu0 %v71
    %324 = vmatprep.subr.mxu0 %v74
    %325 = vmatpush1.msra.mxu0 %v73
    %326 = vmatprep.subr.mxu0 %v76
    %327 = vmatpush1.msra.mxu0 %v75
    %328 = vmatprep.subr.mxu0 %v78
    %329 = vmatpush1.msra.mxu0 %v77
    %330 = vmatprep.subr.mxu0 %v80
    %331 = vmatpush1.msra.mxu0 %v79
    %332 = vmatprep.subr.mxu0 0.0
    %333 = vmatpush1.msra.mxu0 0.0
    %334 = vmatprep.subr.mxu0 0.0
    %335 = vmatpush1.msra.mxu0 0.0
    %336 = vmatprep.subr.mxu0 0.0
    %337 = vmatpush1.msra.mxu0 0.0
    %338 = vmatprep.subr.mxu0 0.0
    %339 = vmatpush1.msra.mxu0 0.0
    %340 = vmatprep.subr.mxu0 0.0
    %341 = vmatpush1.msra.mxu0 0.0
    %342 = vmatprep.subr.mxu0 0.0
    %343 = vmatpush1.msra.mxu0 0.0
    %344 = vmatprep.subr.mxu0 0.0
    %345 = vmatpush1.msra.mxu0 0.0
    %346 = vmatprep.subr.mxu0 0.0
    %347 = vmatpush1.msra.mxu0 0.0
    %348 = vmatprep.subr.mxu0 0.0
    %349 = vmatpush1.msra.mxu0 0.0
    %350 = vmatprep.subr.mxu0 0.0
    %351 = vmatpush1.msra.mxu0 0.0
    %352 = vmatprep.subr.mxu0 0.0
    %353 = vmatpush1.msra.mxu0 0.0
    %354 = vmatprep.subr.mxu0 0.0
    %355 = vmatpush1.msra.mxu0 0.0
    %356 = vmatprep.subr.mxu0 0.0
    %357 = vmatpush1.msra.mxu0 0.0
    %358 = vmatprep.subr.mxu0 0.0
    %359 = vmatpush1.msra.mxu0 0.0
    %360 = vmatprep.subr.mxu0 0.0
    %361 = vmatpush1.msra.mxu0 0.0
    %362 = vmatprep.subr.mxu0 0.0
    %363 = vmatpush1.msra.mxu0 0.0
    %364 = vmatprep.subr.mxu0 0.0
    %365 = vmatpush1.msra.mxu0 0.0
    %366 = vmatprep.subr.mxu0 0.0
    %367 = vmatpush1.msra.mxu0 0.0
    %368 = vmatprep.subr.mxu0 0.0
    %369 = vmatpush1.msra.mxu0 0.0
    %370 = vmatprep.subr.mxu0 0.0
    %371 = vmatpush1.msra.mxu0 0.0
    %372 = vmatprep.subr.mxu0 0.0
    %373 = vmatpush1.msra.mxu0 0.0
    %374 = vmatprep.subr.mxu0 0.0
    %375 = vmatpush1.msra.mxu0 0.0
    %376 = vmatprep.subr.mxu0 0.0
    %377 = vmatpush1.msra.mxu0 0.0
    %378 = vmatprep.subr.mxu0 0.0
    %379 = vmatpush1.msra.mxu0 0.0
    %380 = vmatprep.mubr.f32.mxu0 0.0
    %381 = vmatmul.mubr.f32.gmra.mrb[0].mxu0 %v311
    %v382 = vpop.f32.mrb[0].mxu0
    %v383 = vadd.f32 0.0, %v382
    %v384 = vpop.f32.mrb[0].mxu0
    %v385 = vadd.f32 0.0, %v384
    %386 = vmatprep.mubr.f32.mxu0 0.0
    %387 = vmatmul.mubr.f32.gmra.mrb[0].mxu0 %v314
    %v388 = vpop.f32.mrb[0].mxu0
    %v389 = vadd.f32 0.0, %v388
    %v390 = vpop.f32.mrb[0].mxu0
    %v391 = vadd.f32 0.0, %v390
    %392 = vdwg.mxu0
    %393 = vmatprep.subr.mxu0 %v203
    %394 = vmatpush1.msra.mxu0 %v202
    %395 = vmatprep.subr.mxu0 %v205
    %396 = vmatpush1.msra.mxu0 %v204
    %397 = vmatprep.subr.mxu0 %v207
    %398 = vmatpush1.msra.mxu0 %v206
    %399 = vmatprep.subr.mxu0 %v209
    %400 = vmatpush1.msra.mxu0 %v208
    %401 = vmatprep.subr.mxu0 %v211
    %402 = vmatpush1.msra.mxu0 %v210
    %403 = vmatprep.subr.mxu0 %v213
    %404 = vmatpush1.msra.mxu0 %v212
    %405 = vmatprep.subr.mxu0 %v215
    %406 = vmatpush1.msra.mxu0 %v214
    %407 = vmatprep.subr.mxu0 %v217
    %408 = vmatpush1.msra.mxu0 %v216
    %409 = vmatprep.subr.mxu0 0.0
    %410 = vmatpush1.msra.mxu0 0.0
    %411 = vmatprep.subr.mxu0 0.0
    %412 = vmatpush1.msra.mxu0 0.0
    %413 = vmatprep.subr.mxu0 0.0
    %414 = vmatpush1.msra.mxu0 0.0
    %415 = vmatprep.subr.mxu0 0.0
    %416 = vmatpush1.msra.mxu0 0.0
    %417 = vmatprep.subr.mxu0 0.0
    %418 = vmatpush1.msra.mxu0 0.0
    %419 = vmatprep.subr.mxu0 0.0
    %420 = vmatpush1.msra.mxu0 0.0
    %421 = vmatprep.subr.mxu0 0.0
    %422 = vmatpush1.msra.mxu0 0.0
    %423 = vmatprep.subr.mxu0 0.0
    %424 = vmatpush1.msra.mxu0 0.0
    %425 = vmatprep.subr.mxu0 0.0
    %426 = vmatpush1.msra.mxu0 0.0
    %427 = vmatprep.subr.mxu0 0.0
    %428 = vmatpush1.msra.mxu0 0.0
    %429 = vmatprep.subr.mxu0 0.0
    %430 = vmatpush1.msra.mxu0 0.0
    %431 = vmatprep.subr.mxu0 0.0
    %432 = vmatpush1.msra.mxu0 0.0
    %433 = vmatprep.subr.mxu0 0.0
    %434 = vmatpush1.msra.mxu0 0.0
    %435 = vmatprep.subr.mxu0 0.0
    %436 = vmatpush1.msra.mxu0 0.0
    %437 = vmatprep.subr.mxu0 0.0
    %438 = vmatpush1.msra.mxu0 0.0
    %439 = vmatprep.subr.mxu0 0.0
    %440 = vmatpush1.msra.mxu0 0.0
    %441 = vmatprep.subr.mxu0 0.0
    %442 = vmatpush1.msra.mxu0 0.0
    %443 = vmatprep.subr.mxu0 0.0
    %444 = vmatpush1.msra.mxu0 0.0
    %445 = vmatprep.subr.mxu0 0.0
    %446 = vmatpush1.msra.mxu0 0.0
    %447 = vmatprep.subr.mxu0 0.0
    %448 = vmatpush1.msra.mxu0 0.0
    %449 = vmatprep.subr.mxu0 0.0
    %450 = vmatpush1.msra.mxu0 0.0
    %451 = vmatprep.subr.mxu0 0.0
    %452 = vmatpush1.msra.mxu0 0.0
    %453 = vmatprep.subr.mxu0 0.0
    %454 = vmatpush1.msra.mxu0 0.0
    %455 = vmatprep.subr.mxu0 0.0
    %456 = vmatpush1.msra.mxu0 0.0
    %457 = vmatprep.mubr.f32.mxu0 0.0
    %458 = vmatmul.mubr.f32.gmra.mrb[0].mxu0 %v228
    %v459 = vpop.f32.mrb[0].mxu0
    %v460 = vadd.f32 %v383, %v459
    %v461 = vpop.f32.mrb[0].mxu0
    %v462 = vadd.f32 %v385, %v461
    %463 = vmatprep.mubr.f32.mxu0 0.0
    %464 = vmatmul.mubr.f32.gmra.mrb[0].mxu0 %v231
    %v465 = vpop.f32.mrb[0].mxu0
    %v466 = vadd.f32 %v389, %v465
    %v467 = vpop.f32.mrb[0].mxu0
    %v468 = vadd.f32 %v391, %v467
    %469 = vdwg.mxu0
    %471 = vset.pattern.permute.xlu0 0
    %472 = vperm.xlu0 %471, %v308
    %v473 = vpop.permute.xlu0 %472
    %476 = vset.pattern.permute.xlu0 0
    %477 = vperm.xlu0 %476, %v309
    %v478 = vpop.permute.xlu0 %477
    %v480 = vadd.f32 %v460, %v473
    %v481 = vadd.f32 %v462, %v473
    %v482 = vadd.f32 %v466, %v478
    %v483 = vadd.f32 %v468, %v478
    %v484 = vtanh.pop %v480
    %v485 = vtanh.pop %v481
    %v486 = vtanh.pop %v482
    %v487 = vtanh.pop %v483
    %488 = vst [vmem:[#allocation7] sm:$0xff] %v484
    %489 = vst [vmem:[#allocation7 + $0x8] sm:$0xff] %v485
    %490 = vst [vmem:[#allocation7 + $0x10] sm:$0xf] %v486
    %491 = vst [vmem:[#allocation7 + $0x18] sm:$0xf] %v487
    // Predicated region
    $region30: #{tpu_custom_call.1} parent=1 // pred_check
      _
    $region31: #{tpu_custom_call.1} parent=1 // pred_check_branch
      %493 = sbr.rel (0) target = $region33
    $region32: #{tpu_custom_call.1} parent=1 // pred_region
      %s495 = ssub.s32 512, 512
      %496 = vsyncadd [#allocation4], %s495
      %s497 = sshll.u32 [#allocation7], 4
      %s498 = int_to_ptr.vmem [resolvable:$true] %s497
      %503 = dma.vmem_to_hbm [thread:$0]  %s498, 512, %s5, [#allocation4], 256, 256, 16
    $region33: #{tpu_custom_call.1} parent=1 // pred_fallthru
      _
    // Predicated region
    $region34: #{tpu_custom_call.1} parent=1 // pred_check
      _
    $region35: #{tpu_custom_call.1} parent=1 // pred_check_branch
      %505 = sbr.rel (0) target = $region37
    $region36: #{tpu_custom_call.1} parent=1 // pred_region
      %506 = dma.done [#allocation4], 512
    $region37: #{tpu_custom_call.1} parent=1 // pred_fallthru
      _
    %507 = vsyncpa [#allocation3], 1
    %508 = vsyncpa [#allocation6], 1
    %509 = vsyncpa [#allocation4], 1

</llo_original>
